<compile_context>
chip_gen: v6e
topology: v6e:2x2x1
jax: 0.10.0
libtpu: 0.0.40
codegen_flags: <defaults>
</compile_context>

<pallas_src>
import functools

import jax
import jax.numpy as jnp
from jax.experimental import pallas as pl
from jax.experimental.pallas import tpu as pltpu


def _min_dist_kernel(x_ref, sh_ref, shsq_ref, o_ref, *, C, L, K, S, TN,
                     use_bf16_cross):
    """One grid step: TN samples, all channels, all windows, all shapelets."""
    W = L - S + 1
    x = x_ref[...]          # (TN, C, L)
    sh = sh_ref[...]        # (C, K, S)   resident across the grid
    shsq = shsq_ref[...]    # (C, K, 1)   precomputed in the wrapper (grid-invariant)

    # im2col once per block: windows[n, c, s, w] = x[n, c, w + s]
    windows = jnp.stack([x[:, :, s:s + W] for s in range(S)], axis=2)  # (TN, C, S, W)

    mm_dtype = jnp.bfloat16 if use_bf16_cross else jnp.float32
    # Broadcast/cast hoisted out of the channel loop (JAX does not CSE broadcasts).
    sh_mm = jnp.broadcast_to(sh[None], (TN, C, K, S)).astype(mm_dtype)
    win_mm = windows.astype(mm_dtype)

    min_d2 = jnp.full((TN, K), jnp.inf, dtype=jnp.float32)
    for c in range(C):  # C is small and static -> unrolled
        wc = windows[:, c]                                   # (TN, S, W) f32
        # ||window||^2 over the window-content axis (VPU + sublane reduce).
        xsq = jnp.sum(wc * wc, axis=1)[:, None, :]           # (TN, 1, W)
        # Cross term on the MXU, batched over the TN samples in this block.
        cross = jnp.einsum('nks,nsw->nkw', sh_mm[:, c], win_mm[:, c],
                           preferred_element_type=jnp.float32)   # (TN, K, W)
        # ||a||^2 + ||b||^2 - 2 a.b, clamped for numerical safety.
        d2 = jnp.maximum(shsq[c][None] + xsq - 2.0 * cross, 0.0)  # (TN, K, W)
        # Min over windows, running min over channels; sqrt deferred to the end.
        min_d2 = jnp.minimum(min_d2, jnp.min(d2, axis=2))          # (TN, K)

    # Single sqrt on the reduced result, single lane-contiguous store.
    o_ref[...] = jnp.sqrt(min_d2)[:, None, :]                      # (TN, 1, K)


def _pick_block_n(N, C, L, K, S, target_bn=8, vmem_budget_bytes=24 << 20):
    """Choose samples-per-block so the block + temporaries stay well inside VMEM
    (budget is conservative so the same choice is safe on v7x's 64 MiB VMEM)."""
    W = L - S + 1
    bn = max(1, min(target_bn, N))
    while bn > 1:
        est = 4 * (2 * bn * C * L            # double-buffered x blocks
                   + C * K * S + C * K       # shapelets + norms (resident)
                   + bn * C * S * W          # im2col windows
                   + 3 * bn * K * W          # cross / d2 temporaries
                   + 4 * bn * K)             # running min + output
        if est <= vmem_budget_bytes:
            break
        bn //= 2
    return bn


def min_euclidean_dist_block(x, shapelets, *, block_n=None, use_bf16_cross=False):
    """Pallas wrapper. x: (N, C, L), shapelets: (C, K, S) -> (N, 1, K) float32."""
    N, C, L = x.shape
    Cs, K, S = shapelets.shape
    assert Cs == C, "channel mismatch between x and shapelets"
    x = x.astype(jnp.float32)
    shapelets = shapelets.astype(jnp.float32)

    if block_n is None:
        block_n = _pick_block_n(N, C, L, K, S)
    TN = max(1, min(block_n, N))

    # Pad the sample axis so the grid divides evenly; padded rows are dropped.
    Np = ((N + TN - 1) // TN) * TN
    if Np != N:
        x = jnp.pad(x, ((0, Np - N), (0, 0), (0, 0)))

    # Grid-invariant shapelet squared norms, hoisted out of the kernel entirely.
    shsq = jnp.sum(shapelets * shapelets, axis=-1, keepdims=True)  # (C, K, 1)

    kernel = functools.partial(_min_dist_kernel, C=C, L=L, K=K, S=S, TN=TN,
                               use_bf16_cross=use_bf16_cross)
    out = pl.pallas_call(
        kernel,
        out_shape=jax.ShapeDtypeStruct((Np, 1, K), jnp.float32),
        grid_spec=pltpu.PrefetchScalarGridSpec(
            num_scalar_prefetch=0,
            grid=(Np // TN,),
            in_specs=[
                pl.BlockSpec((TN, C, L), lambda n: (n, 0, 0)),   # TN samples per step
                pl.BlockSpec((C, K, S), lambda n: (0, 0, 0)),    # shapelets, resident
                pl.BlockSpec((C, K, 1), lambda n: (0, 0, 0)),    # shapelet norms, resident
            ],
            out_specs=pl.BlockSpec((TN, 1, K), lambda n: (n, 0, 0)),
        ),
        compiler_params=pltpu.CompilerParams(dimension_semantics=("parallel",)),
    )(x, shapelets, shsq)
    return out[:N]


def _reference(x, shapelets):
    """Pure-JAX reference matching the PyTorch forward."""
    N, C, L = x.shape
    _, K, S = shapelets.shape
    W = L - S + 1
    idx = jnp.arange(W)[:, None] + jnp.arange(S)[None, :]              # (W, S)
    windows = x[:, :, idx]                                             # (N, C, W, S)
    diff = windows[:, :, :, None, :] - shapelets[None, :, None, :, :]  # (N, C, W, K, S)
    d = jnp.sqrt(jnp.sum(diff * diff, axis=-1))                        # (N, C, W, K)
    d = jnp.min(d, axis=2)                                             # min over windows
    d = jnp.min(d, axis=1)                                             # min over channels
    return d.reshape(N, 1, K)


if __name__ == "__main__":
    # Module config: shapelets_size=S, num_shapelets=K, in_channels=C
    N, C, L = 2, 4, 16
    K, S = 6, 8

    key = jax.random.PRNGKey(0)
    kx, ksh, kx2 = jax.random.split(key, 3)

    # Deterministic parameter init (mirrors torch.randn(in_channels, num_shapelets, shapelets_size))
    shapelets = jax.random.normal(ksh, (C, K, S), dtype=jnp.float32)
    high = jnp.ones((K, 1), dtype=jnp.float32)  # nn.Parameter `high`; unused in forward

    # Example input: (num_samples, in_channels, len_ts)
    x = jax.random.normal(kx, (N, C, L), dtype=jnp.float32)

    out = min_euclidean_dist_block(x, shapelets)
    jax.block_until_ready(out)
    ref = _reference(x, shapelets)
    assert out.shape == (N, 1, K), out.shape
    assert jnp.allclose(out, ref, atol=1e-4, rtol=1e-4), "mismatch vs reference"

    # Second check: N not divisible by the sample block -> exercises padding path.
    x2 = jax.random.normal(kx2, (5, C, L), dtype=jnp.float32)
    out2 = min_euclidean_dist_block(x2, shapelets, block_n=2)
    jax.block_until_ready(out2)
    ref2 = _reference(x2, shapelets)
    assert out2.shape == (5, 1, K), out2.shape
    assert jnp.allclose(out2, ref2, atol=1e-4, rtol=1e-4), "mismatch vs reference (padded)"

    print("KERNEL_OK")
</pallas_src>

<mosaic_0001>
module attributes {stable_mosaic.version = 11 : i64} {
  func.func @_min_dist_kernel(%arg0: i32, %arg1: memref<2x4x16xf32, #tpu.memory_space<vmem>>, %arg2: memref<4x6x8xf32, #tpu.memory_space<vmem>>, %arg3: memref<4x6x1xf32, #tpu.memory_space<vmem>>, %arg4: memref<2x1x6xf32, #tpu.memory_space<vmem>>) attributes {dimension_semantics = [#tpu.dimension_semantics<parallel>], iteration_bounds = array<i64: 1>, scalar_prefetch = 0 : i64, scratch_operands = 0 : i64, tpu.core_type = #tpu.core_type<tc>, window_params = [{transform_indices = @transform_0, window_bounds = array<i64: 2, 4, 16>}, {pipeline_mode = #tpu.pipeline_mode<synchronous>, transform_indices = @transform_1, window_bounds = array<i64: 4, 6, 8>}, {pipeline_mode = #tpu.pipeline_mode<synchronous>, transform_indices = @transform_2, window_bounds = array<i64: 4, 6, 1>}, {transform_indices = @transform_3, window_bounds = array<i64: 2, 1, 6>}]} {
    %c0 = arith.constant 0 : index
    %c0_0 = arith.constant 0 : index
    %c0_1 = arith.constant 0 : index
    %0 = vector.load %arg1[%c0, %c0_0, %c0_1] : memref<2x4x16xf32, #tpu.memory_space<vmem>>, vector<2x4x16xf32>
    %c0_2 = arith.constant 0 : index
    %c0_3 = arith.constant 0 : index
    %c0_4 = arith.constant 0 : index
    %1 = vector.load %arg2[%c0_2, %c0_3, %c0_4] : memref<4x6x8xf32, #tpu.memory_space<vmem>>, vector<4x6x8xf32>
    %c0_5 = arith.constant 0 : index
    %c0_6 = arith.constant 0 : index
    %c0_7 = arith.constant 0 : index
    %2 = vector.load %arg3[%c0_5, %c0_6, %c0_7] : memref<4x6x1xf32, #tpu.memory_space<vmem>>, vector<4x6x1xf32>
    %3 = vector.extract_strided_slice %0 {offsets = [0, 0, 0], sizes = [2, 4, 9], strides = [1, 1, 1]} : vector<2x4x16xf32> to vector<2x4x9xf32>
    %4 = vector.extract_strided_slice %0 {offsets = [0, 0, 1], sizes = [2, 4, 9], strides = [1, 1, 1]} : vector<2x4x16xf32> to vector<2x4x9xf32>
    %5 = vector.extract_strided_slice %0 {offsets = [0, 0, 2], sizes = [2, 4, 9], strides = [1, 1, 1]} : vector<2x4x16xf32> to vector<2x4x9xf32>
    %6 = vector.extract_strided_slice %0 {offsets = [0, 0, 3], sizes = [2, 4, 9], strides = [1, 1, 1]} : vector<2x4x16xf32> to vector<2x4x9xf32>
    %7 = vector.extract_strided_slice %0 {offsets = [0, 0, 4], sizes = [2, 4, 9], strides = [1, 1, 1]} : vector<2x4x16xf32> to vector<2x4x9xf32>
    %8 = vector.extract_strided_slice %0 {offsets = [0, 0, 5], sizes = [2, 4, 9], strides = [1, 1, 1]} : vector<2x4x16xf32> to vector<2x4x9xf32>
    %9 = vector.extract_strided_slice %0 {offsets = [0, 0, 6], sizes = [2, 4, 9], strides = [1, 1, 1]} : vector<2x4x16xf32> to vector<2x4x9xf32>
    %10 = vector.extract_strided_slice %0 {offsets = [0, 0, 7], sizes = [2, 4, 9], strides = [1, 1, 1]} : vector<2x4x16xf32> to vector<2x4x9xf32>
    %11 = vector.shape_cast %3 : vector<2x4x9xf32> to vector<2x4x1x9xf32>
    %12 = vector.shape_cast %4 : vector<2x4x9xf32> to vector<2x4x1x9xf32>
    %13 = vector.shape_cast %5 : vector<2x4x9xf32> to vector<2x4x1x9xf32>
    %14 = vector.shape_cast %6 : vector<2x4x9xf32> to vector<2x4x1x9xf32>
    %15 = vector.shape_cast %7 : vector<2x4x9xf32> to vector<2x4x1x9xf32>
    %16 = vector.shape_cast %8 : vector<2x4x9xf32> to vector<2x4x1x9xf32>
    %17 = vector.shape_cast %9 : vector<2x4x9xf32> to vector<2x4x1x9xf32>
    %18 = vector.shape_cast %10 : vector<2x4x9xf32> to vector<2x4x1x9xf32>
    %19 = tpu.concatenate %11, %12, %13, %14, %15, %16, %17, %18 in 2 : vector<2x4x1x9xf32>, vector<2x4x1x9xf32>, vector<2x4x1x9xf32>, vector<2x4x1x9xf32>, vector<2x4x1x9xf32>, vector<2x4x1x9xf32>, vector<2x4x1x9xf32>, vector<2x4x1x9xf32> -> vector<2x4x8x9xf32>
    %20 = vector.shape_cast %1 : vector<4x6x8xf32> to vector<1x4x6x8xf32>
    %21 = vector.shape_cast %20 : vector<1x4x6x8xf32> to vector<1x4x6x8xf32>
    %22 = vector.broadcast %21 : vector<1x4x6x8xf32> to vector<2x4x6x8xf32>
    %cst = arith.constant 0x7F800000 : f32
    %23 = vector.broadcast %cst : f32 to vector<2x6xf32>
    %24 = vector.extract_strided_slice %19 {offsets = [0, 0, 0, 0], sizes = [2, 1, 8, 9], strides = [1, 1, 1, 1]} : vector<2x4x8x9xf32> to vector<2x1x8x9xf32>
    %25 = vector.shape_cast %24 : vector<2x1x8x9xf32> to vector<2x8x9xf32>
    %26 = arith.mulf %25, %25 : vector<2x8x9xf32>
    %cst_8 = arith.constant dense<0.000000e+00> : vector<2x9xf32>
    %27 = vector.multi_reduction <add>, %26, %cst_8 [1] : vector<2x8x9xf32> to vector<2x9xf32>
    %28 = vector.shape_cast %27 : vector<2x9xf32> to vector<2x1x9xf32>
    %29 = vector.extract_strided_slice %22 {offsets = [0, 0, 0, 0], sizes = [2, 1, 6, 8], strides = [1, 1, 1, 1]} : vector<2x4x6x8xf32> to vector<2x1x6x8xf32>
    %30 = vector.shape_cast %29 : vector<2x1x6x8xf32> to vector<2x6x8xf32>
    %31 = vector.extract_strided_slice %19 {offsets = [0, 0, 0, 0], sizes = [2, 1, 8, 9], strides = [1, 1, 1, 1]} : vector<2x4x8x9xf32> to vector<2x1x8x9xf32>
    %32 = vector.shape_cast %31 : vector<2x1x8x9xf32> to vector<2x8x9xf32>
    "tpu.trace_start"() <{level = 10 : i32, message = "nks,nsw->nkw"}> : () -> ()
    %cst_9 = arith.constant dense<0.000000e+00> : vector<2x6x9xf32>
    %33 = tpu.matmul %30, %32, %cst_9 {dimension_numbers = #tpu.dot_dimension_numbers<[2], [1], [1], [2], [0, 0, 0, 1, 1, 2], [0], [0]>} : vector<2x6x8xf32>, vector<2x8x9xf32>, vector<2x6x9xf32> -> vector<2x6x9xf32>
    "tpu.trace_stop"() : () -> ()
    %34 = vector.extract_strided_slice %2 {offsets = [0, 0, 0], sizes = [1, 6, 1], strides = [1, 1, 1]} : vector<4x6x1xf32> to vector<1x6x1xf32>
    %35 = vector.shape_cast %34 : vector<1x6x1xf32> to vector<6x1xf32>
    %36 = vector.shape_cast %35 : vector<6x1xf32> to vector<1x6x1xf32>
    %37 = vector.broadcast %36 : vector<1x6x1xf32> to vector<2x6x9xf32>
    %38 = vector.broadcast %28 : vector<2x1x9xf32> to vector<2x6x9xf32>
    %39 = arith.addf %37, %38 : vector<2x6x9xf32>
    %cst_10 = arith.constant 2.000000e+00 : f32
    %40 = vector.broadcast %cst_10 : f32 to vector<2x6x9xf32>
    %41 = arith.mulf %40, %33 : vector<2x6x9xf32>
    %42 = arith.subf %39, %41 : vector<2x6x9xf32>
    %cst_11 = arith.constant 0.000000e+00 : f32
    %43 = vector.broadcast %cst_11 : f32 to vector<2x6x9xf32>
    %44 = arith.maximumf %42, %43 : vector<2x6x9xf32>
    %cst_12 = arith.constant dense<0x7F800000> : vector<2x6xf32>
    %45 = vector.multi_reduction <minimumf>, %44, %cst_12 [2] : vector<2x6x9xf32> to vector<2x6xf32>
    %46 = arith.minimumf %23, %45 : vector<2x6xf32>
    %47 = vector.extract_strided_slice %19 {offsets = [0, 1, 0, 0], sizes = [2, 1, 8, 9], strides = [1, 1, 1, 1]} : vector<2x4x8x9xf32> to vector<2x1x8x9xf32>
    %48 = vector.shape_cast %47 : vector<2x1x8x9xf32> to vector<2x8x9xf32>
    %49 = arith.mulf %48, %48 : vector<2x8x9xf32>
    %cst_13 = arith.constant dense<0.000000e+00> : vector<2x9xf32>
    %50 = vector.multi_reduction <add>, %49, %cst_13 [1] : vector<2x8x9xf32> to vector<2x9xf32>
    %51 = vector.shape_cast %50 : vector<2x9xf32> to vector<2x1x9xf32>
    %52 = vector.extract_strided_slice %22 {offsets = [0, 1, 0, 0], sizes = [2, 1, 6, 8], strides = [1, 1, 1, 1]} : vector<2x4x6x8xf32> to vector<2x1x6x8xf32>
    %53 = vector.shape_cast %52 : vector<2x1x6x8xf32> to vector<2x6x8xf32>
    %54 = vector.extract_strided_slice %19 {offsets = [0, 1, 0, 0], sizes = [2, 1, 8, 9], strides = [1, 1, 1, 1]} : vector<2x4x8x9xf32> to vector<2x1x8x9xf32>
    %55 = vector.shape_cast %54 : vector<2x1x8x9xf32> to vector<2x8x9xf32>
    "tpu.trace_start"() <{level = 10 : i32, message = "nks,nsw->nkw"}> : () -> ()
    %cst_14 = arith.constant dense<0.000000e+00> : vector<2x6x9xf32>
    %56 = tpu.matmul %53, %55, %cst_14 {dimension_numbers = #tpu.dot_dimension_numbers<[2], [1], [1], [2], [0, 0, 0, 1, 1, 2], [0], [0]>} : vector<2x6x8xf32>, vector<2x8x9xf32>, vector<2x6x9xf32> -> vector<2x6x9xf32>
    "tpu.trace_stop"() : () -> ()
    %57 = vector.extract_strided_slice %2 {offsets = [1, 0, 0], sizes = [1, 6, 1], strides = [1, 1, 1]} : vector<4x6x1xf32> to vector<1x6x1xf32>
    %58 = vector.shape_cast %57 : vector<1x6x1xf32> to vector<6x1xf32>
    %59 = vector.shape_cast %58 : vector<6x1xf32> to vector<1x6x1xf32>
    %60 = vector.broadcast %59 : vector<1x6x1xf32> to vector<2x6x9xf32>
    %61 = vector.broadcast %51 : vector<2x1x9xf32> to vector<2x6x9xf32>
    %62 = arith.addf %60, %61 : vector<2x6x9xf32>
    %cst_15 = arith.constant 2.000000e+00 : f32
    %63 = vector.broadcast %cst_15 : f32 to vector<2x6x9xf32>
    %64 = arith.mulf %63, %56 : vector<2x6x9xf32>
    %65 = arith.subf %62, %64 : vector<2x6x9xf32>
    %cst_16 = arith.constant 0.000000e+00 : f32
    %66 = vector.broadcast %cst_16 : f32 to vector<2x6x9xf32>
    %67 = arith.maximumf %65, %66 : vector<2x6x9xf32>
    %cst_17 = arith.constant dense<0x7F800000> : vector<2x6xf32>
    %68 = vector.multi_reduction <minimumf>, %67, %cst_17 [2] : vector<2x6x9xf32> to vector<2x6xf32>
    %69 = arith.minimumf %46, %68 : vector<2x6xf32>
    %70 = vector.extract_strided_slice %19 {offsets = [0, 2, 0, 0], sizes = [2, 1, 8, 9], strides = [1, 1, 1, 1]} : vector<2x4x8x9xf32> to vector<2x1x8x9xf32>
    %71 = vector.shape_cast %70 : vector<2x1x8x9xf32> to vector<2x8x9xf32>
    %72 = arith.mulf %71, %71 : vector<2x8x9xf32>
    %cst_18 = arith.constant dense<0.000000e+00> : vector<2x9xf32>
    %73 = vector.multi_reduction <add>, %72, %cst_18 [1] : vector<2x8x9xf32> to vector<2x9xf32>
    %74 = vector.shape_cast %73 : vector<2x9xf32> to vector<2x1x9xf32>
    %75 = vector.extract_strided_slice %22 {offsets = [0, 2, 0, 0], sizes = [2, 1, 6, 8], strides = [1, 1, 1, 1]} : vector<2x4x6x8xf32> to vector<2x1x6x8xf32>
    %76 = vector.shape_cast %75 : vector<2x1x6x8xf32> to vector<2x6x8xf32>
    %77 = vector.extract_strided_slice %19 {offsets = [0, 2, 0, 0], sizes = [2, 1, 8, 9], strides = [1, 1, 1, 1]} : vector<2x4x8x9xf32> to vector<2x1x8x9xf32>
    %78 = vector.shape_cast %77 : vector<2x1x8x9xf32> to vector<2x8x9xf32>
    "tpu.trace_start"() <{level = 10 : i32, message = "nks,nsw->nkw"}> : () -> ()
    %cst_19 = arith.constant dense<0.000000e+00> : vector<2x6x9xf32>
    %79 = tpu.matmul %76, %78, %cst_19 {dimension_numbers = #tpu.dot_dimension_numbers<[2], [1], [1], [2], [0, 0, 0, 1, 1, 2], [0], [0]>} : vector<2x6x8xf32>, vector<2x8x9xf32>, vector<2x6x9xf32> -> vector<2x6x9xf32>
    "tpu.trace_stop"() : () -> ()
    %80 = vector.extract_strided_slice %2 {offsets = [2, 0, 0], sizes = [1, 6, 1], strides = [1, 1, 1]} : vector<4x6x1xf32> to vector<1x6x1xf32>
    %81 = vector.shape_cast %80 : vector<1x6x1xf32> to vector<6x1xf32>
    %82 = vector.shape_cast %81 : vector<6x1xf32> to vector<1x6x1xf32>
    %83 = vector.broadcast %82 : vector<1x6x1xf32> to vector<2x6x9xf32>
    %84 = vector.broadcast %74 : vector<2x1x9xf32> to vector<2x6x9xf32>
    %85 = arith.addf %83, %84 : vector<2x6x9xf32>
    %cst_20 = arith.constant 2.000000e+00 : f32
    %86 = vector.broadcast %cst_20 : f32 to vector<2x6x9xf32>
    %87 = arith.mulf %86, %79 : vector<2x6x9xf32>
    %88 = arith.subf %85, %87 : vector<2x6x9xf32>
    %cst_21 = arith.constant 0.000000e+00 : f32
    %89 = vector.broadcast %cst_21 : f32 to vector<2x6x9xf32>
    %90 = arith.maximumf %88, %89 : vector<2x6x9xf32>
    %cst_22 = arith.constant dense<0x7F800000> : vector<2x6xf32>
    %91 = vector.multi_reduction <minimumf>, %90, %cst_22 [2] : vector<2x6x9xf32> to vector<2x6xf32>
    %92 = arith.minimumf %69, %91 : vector<2x6xf32>
    %93 = vector.extract_strided_slice %19 {offsets = [0, 3, 0, 0], sizes = [2, 1, 8, 9], strides = [1, 1, 1, 1]} : vector<2x4x8x9xf32> to vector<2x1x8x9xf32>
    %94 = vector.shape_cast %93 : vector<2x1x8x9xf32> to vector<2x8x9xf32>
    %95 = arith.mulf %94, %94 : vector<2x8x9xf32>
    %cst_23 = arith.constant dense<0.000000e+00> : vector<2x9xf32>
    %96 = vector.multi_reduction <add>, %95, %cst_23 [1] : vector<2x8x9xf32> to vector<2x9xf32>
    %97 = vector.shape_cast %96 : vector<2x9xf32> to vector<2x1x9xf32>
    %98 = vector.extract_strided_slice %22 {offsets = [0, 3, 0, 0], sizes = [2, 1, 6, 8], strides = [1, 1, 1, 1]} : vector<2x4x6x8xf32> to vector<2x1x6x8xf32>
    %99 = vector.shape_cast %98 : vector<2x1x6x8xf32> to vector<2x6x8xf32>
    %100 = vector.extract_strided_slice %19 {offsets = [0, 3, 0, 0], sizes = [2, 1, 8, 9], strides = [1, 1, 1, 1]} : vector<2x4x8x9xf32> to vector<2x1x8x9xf32>
    %101 = vector.shape_cast %100 : vector<2x1x8x9xf32> to vector<2x8x9xf32>
    "tpu.trace_start"() <{level = 10 : i32, message = "nks,nsw->nkw"}> : () -> ()
    %cst_24 = arith.constant dense<0.000000e+00> : vector<2x6x9xf32>
    %102 = tpu.matmul %99, %101, %cst_24 {dimension_numbers = #tpu.dot_dimension_numbers<[2], [1], [1], [2], [0, 0, 0, 1, 1, 2], [0], [0]>} : vector<2x6x8xf32>, vector<2x8x9xf32>, vector<2x6x9xf32> -> vector<2x6x9xf32>
    "tpu.trace_stop"() : () -> ()
    %103 = vector.extract_strided_slice %2 {offsets = [3, 0, 0], sizes = [1, 6, 1], strides = [1, 1, 1]} : vector<4x6x1xf32> to vector<1x6x1xf32>
    %104 = vector.shape_cast %103 : vector<1x6x1xf32> to vector<6x1xf32>
    %105 = vector.shape_cast %104 : vector<6x1xf32> to vector<1x6x1xf32>
    %106 = vector.broadcast %105 : vector<1x6x1xf32> to vector<2x6x9xf32>
    %107 = vector.broadcast %97 : vector<2x1x9xf32> to vector<2x6x9xf32>
    %108 = arith.addf %106, %107 : vector<2x6x9xf32>
    %cst_25 = arith.constant 2.000000e+00 : f32
    %109 = vector.broadcast %cst_25 : f32 to vector<2x6x9xf32>
    %110 = arith.mulf %109, %102 : vector<2x6x9xf32>
    %111 = arith.subf %108, %110 : vector<2x6x9xf32>
    %cst_26 = arith.constant 0.000000e+00 : f32
    %112 = vector.broadcast %cst_26 : f32 to vector<2x6x9xf32>
    %113 = arith.maximumf %111, %112 : vector<2x6x9xf32>
    %cst_27 = arith.constant dense<0x7F800000> : vector<2x6xf32>
    %114 = vector.multi_reduction <minimumf>, %113, %cst_27 [2] : vector<2x6x9xf32> to vector<2x6xf32>
    %115 = arith.minimumf %92, %114 : vector<2x6xf32>
    %116 = math.sqrt %115 : vector<2x6xf32>
    %117 = vector.shape_cast %116 : vector<2x6xf32> to vector<2x1x6xf32>
    %c0_28 = arith.constant 0 : index
    %c0_29 = arith.constant 0 : index
    %c0_30 = arith.constant 0 : index
    %118 = vector.load %arg4[%c0_28, %c0_29, %c0_30] : memref<2x1x6xf32, #tpu.memory_space<vmem>>, vector<2x1x6xf32>
    tpu.vector_store %arg4[%c0_28, %c0_29, %c0_30], %117 {strides = array<i32>} : memref<2x1x6xf32, #tpu.memory_space<vmem>>, vector<2x1x6xf32>,
    return
  }
  func.func @transform_0(%arg0: i32) -> (i32, i32, i32) {
    %c0_i32 = arith.constant 0 : i32
    %c0_i32_0 = arith.constant 0 : i32
    %c0_i32_1 = arith.constant 0 : i32
    return %arg0, %c0_i32, %c0_i32_0 : i32, i32, i32
  }
  func.func @transform_1(%arg0: i32) -> (i32, i32, i32) {
    %c0_i32 = arith.constant 0 : i32
    %c0_i32_0 = arith.constant 0 : i32
    %c0_i32_1 = arith.constant 0 : i32
    %c0_i32_2 = arith.constant 0 : i32
    return %c0_i32, %c0_i32_0, %c0_i32_1 : i32, i32, i32
  }
  func.func @transform_2(%arg0: i32) -> (i32, i32, i32) {
    %c0_i32 = arith.constant 0 : i32
    %c0_i32_0 = arith.constant 0 : i32
    %c0_i32_1 = arith.constant 0 : i32
    %c0_i32_2 = arith.constant 0 : i32
    return %c0_i32, %c0_i32_0, %c0_i32_1 : i32, i32, i32
  }
  func.func @transform_3(%arg0: i32) -> (i32, i32, i32) {
    %c0_i32 = arith.constant 0 : i32
    %c0_i32_0 = arith.constant 0 : i32
    %c0_i32_1 = arith.constant 0 : i32
    return %arg0, %c0_i32, %c0_i32_0 : i32, i32, i32
  }
}

</mosaic_0001>

<llo_original>
// kernel: tpu_custom_call.1
$region0: #{tpu_custom_call.1}
  #allocation0 [shape = 'u32[]', space=smem, size = 0x4, offset = 0x4, fixed_abs, tag = 'smem constant byte address 0x4 - core index']
  #allocation1 [shape = 'u32[144,128]{1,0:T(1,128)}', space=vmem, size = 0x12000, scoped, tag = 'internal scratch']
  %s0 = inlined_call_operand.vmem [shape: f32[2,4,16], index: 0, kind: input, shape index: {}]
  %s1 = inlined_call_operand.vmem [shape: f32[4,6,8], index: 1, kind: input, shape index: {}]
  %s2 = inlined_call_operand.vmem [shape: f32[4,6,1], index: 2, kind: input, shape index: {}]
  %s3 = inlined_call_operand.hbm [shape: f32[2,1,6], index: 3, kind: output, shape index: {}]
  %s4 = sld [smem:[#allocation0]]
  $region22: #{tpu_custom_call.1} parent=0
    _
  %s6 = ssub.s32 1, %s4
  %s7 = scalar_select 0, %s6, %s4
  $region1: #{tpu_custom_call.1} parent=0
    #allocation2 [shape = 'u8[1024]{0}', space=vmem, size = 0x400, scoped, tag = 'output window, operand 0, single buffered']
    #allocation3 [shape = 's32[1]{0}', space=sflag, size = 0x4, scoped, tag = 'scoped memory for tpu_custom_call.1']
    %8 = vsyncpa [#allocation3], 0
    // Predicated region
    $region2: #{tpu_custom_call.1} parent=1 // pred_check
      _
    $region3: #{tpu_custom_call.1} parent=1 // pred_check_branch
      %10 = sbr.rel (0) target = $region5
    $region4: #{tpu_custom_call.1} parent=1 // pred_region
      _
    $region5: #{tpu_custom_call.1} parent=1 // pred_fallthru
      _
    // Predicated region
    $region6: #{tpu_custom_call.1} parent=1 // pred_check
      _
    $region7: #{tpu_custom_call.1} parent=1 // pred_check_branch
      %12 = sbr.rel (0) target = $region9
    $region8: #{tpu_custom_call.1} parent=1 // pred_region
      _
    $region9: #{tpu_custom_call.1} parent=1 // pred_fallthru
      _
    // Predicated region
    $region10: #{tpu_custom_call.1} parent=1 // pred_check
      _
    $region11: #{tpu_custom_call.1} parent=1 // pred_check_branch
      %14 = sbr.rel (0) target = $region13
    $region12: #{tpu_custom_call.1} parent=1 // pred_region
      _
    $region13: #{tpu_custom_call.1} parent=1 // pred_fallthru
      _
    %v15 = vld [vmem:[%s0] sm:$0xf]
    %v16 = vld [vmem:[%s0 + $0x4] sm:$0xf]
    %v17 = vld [vmem:[%s1] sm:$0x3f]
    %v18 = vld [vmem:[%s1 + $0x8] sm:$0x3f]
    %v19 = vld [vmem:[%s1 + $0x10] sm:$0x3f]
    %v20 = vld [vmem:[%s1 + $0x18] sm:$0x3f]
    %v21 = vld [vmem:[%s2] sm:$0x3f]
    %v22 = vld [vmem:[%s2 + $0x8] sm:$0x3f]
    %v23 = vld [vmem:[%s2 + $0x10] sm:$0x3f]
    %v24 = vld [vmem:[%s2 + $0x18] sm:$0x3f]
    %v28 = vunpack.c.l.s4 1966171168
    %v29 = vunpack.c.0.s8 %v28
    %v30 = vlaneseq
    %v31 = vshrl.u32 %v30, 7
    %v32 = vsub.s32 %v29, %v31
    %v33 = vrot.slane %v15, %v32
    %v34 = vcombine.high %v33, %v33
    %v36 = vunpack.c.l.s4 1966171168
    %v37 = vunpack.c.0.s8 %v36
    %v38 = vlaneseq
    %v39 = vshrl.u32 %v38, 7
    %v40 = vsub.s32 %v37, %v39
    %v41 = vrot.slane %v33, %v40
    %v43 = vunpack.c.l.s4 1966171168
    %v44 = vunpack.c.0.s8 %v43
    %v45 = vlaneseq
    %v46 = vshrl.u32 %v45, 7
    %v47 = vsub.s32 %v44, %v46
    %v48 = vrot.slane %v34, %v47
    %v49 = vcombine.high %v41, %v41
    %v50 = vcombine.high %v48, %v48
    %v52 = vunpack.c.l.s4 1966171168
    %v53 = vunpack.c.0.s8 %v52
    %v54 = vlaneseq
    %v55 = vshrl.u32 %v54, 7
    %v56 = vsub.s32 %v53, %v55
    %v57 = vrot.slane %v16, %v56
    %v58 = vcombine.high %v57, %v57
    %v60 = vunpack.c.l.s4 1966171168
    %v61 = vunpack.c.0.s8 %v60
    %v62 = vlaneseq
    %v63 = vshrl.u32 %v62, 7
    %v64 = vsub.s32 %v61, %v63
    %v65 = vrot.slane %v57, %v64
    %v67 = vunpack.c.l.s4 1966171168
    %v68 = vunpack.c.0.s8 %v67
    %v69 = vlaneseq
    %v70 = vshrl.u32 %v69, 7
    %v71 = vsub.s32 %v68, %v70
    %v72 = vrot.slane %v58, %v71
    %v73 = vcombine.high %v65, %v65
    %v74 = vcombine.high %v72, %v72
    %v83 = vlaneseq
    %v84 = vshrl.u32 %v83, 7
    %v85 = vsub.s32 0, %v84
    %v86 = vrot.slane %v41, %v85
    %v87 = vlaneseq
    %v88 = vshrl.u32 %v87, 7
    %v89 = vsub.s32 0, %v88
    %v90 = vrot.slane %v48, %v89
    %v91 = vlaneseq
    %v92 = vshrl.u32 %v91, 7
    %v93 = vsub.s32 0, %v92
    %v94 = vrot.slane %v49, %v93
    %v95 = vlaneseq
    %v96 = vshrl.u32 %v95, 7
    %v97 = vsub.s32 0, %v96
    %v98 = vrot.slane %v50, %v97
    %v99 = vlaneseq
    %v100 = vshrl.u32 %v99, 7
    %v101 = vsub.s32 0, %v100
    %v102 = vrot.slane %v65, %v101
    %v103 = vlaneseq
    %v104 = vshrl.u32 %v103, 7
    %v105 = vsub.s32 0, %v104
    %v106 = vrot.slane %v72, %v105
    %v107 = vlaneseq
    %v108 = vshrl.u32 %v107, 7
    %v109 = vsub.s32 0, %v108
    %v110 = vrot.slane %v73, %v109
    %v111 = vlaneseq
    %v112 = vshrl.u32 %v111, 7
    %v113 = vsub.s32 0, %v112
    %v114 = vrot.slane %v74, %v113
    %115 = vrot.lane.b32.xlu0 %v86, 127
    %v116 = vpop.permute.xlu0 %115
    %117 = vrot.lane.b32.xlu0 %v90, 127
    %v118 = vpop.permute.xlu0 %117
    %119 = vrot.lane.b32.xlu0 %v94, 127
    %v120 = vpop.permute.xlu0 %119
    %121 = vrot.lane.b32.xlu0 %v98, 127
    %v122 = vpop.permute.xlu0 %121
    %123 = vrot.lane.b32.xlu0 %v102, 127
    %v124 = vpop.permute.xlu0 %123
    %125 = vrot.lane.b32.xlu0 %v106, 127
    %v126 = vpop.permute.xlu0 %125
    %127 = vrot.lane.b32.xlu0 %v110, 127
    %v128 = vpop.permute.xlu0 %127
    %129 = vrot.lane.b32.xlu0 %v114, 127
    %v130 = vpop.permute.xlu0 %129
    %139 = vrot.lane.b32.xlu0 %v86, 126
    %v140 = vpop.permute.xlu0 %139
    %141 = vrot.lane.b32.xlu0 %v90, 126
    %v142 = vpop.permute.xlu0 %141
    %143 = vrot.lane.b32.xlu0 %v94, 126
    %v144 = vpop.permute.xlu0 %143
    %145 = vrot.lane.b32.xlu0 %v98, 126
    %v146 = vpop.permute.xlu0 %145
    %147 = vrot.lane.b32.xlu0 %v102, 126
    %v148 = vpop.permute.xlu0 %147
    %149 = vrot.lane.b32.xlu0 %v106, 126
    %v150 = vpop.permute.xlu0 %149
    %151 = vrot.lane.b32.xlu0 %v110, 126
    %v152 = vpop.permute.xlu0 %151
    %153 = vrot.lane.b32.xlu0 %v114, 126
    %v154 = vpop.permute.xlu0 %153
    %163 = vrot.lane.b32.xlu0 %v86, 125
    %v164 = vpop.permute.xlu0 %163
    %165 = vrot.lane.b32.xlu0 %v90, 125
    %v166 = vpop.permute.xlu0 %165
    %167 = vrot.lane.b32.xlu0 %v94, 125
    %v168 = vpop.permute.xlu0 %167
    %169 = vrot.lane.b32.xlu0 %v98, 125
    %v170 = vpop.permute.xlu0 %169
    %171 = vrot.lane.b32.xlu0 %v102, 125
    %v172 = vpop.permute.xlu0 %171
    %173 = vrot.lane.b32.xlu0 %v106, 125
    %v174 = vpop.permute.xlu0 %173
    %175 = vrot.lane.b32.xlu0 %v110, 125
    %v176 = vpop.permute.xlu0 %175
    %177 = vrot.lane.b32.xlu0 %v114, 125
    %v178 = vpop.permute.xlu0 %177
    %187 = vrot.lane.b32.xlu0 %v86, 124
    %v188 = vpop.permute.xlu0 %187
    %189 = vrot.lane.b32.xlu0 %v90, 124
    %v190 = vpop.permute.xlu0 %189
    %191 = vrot.lane.b32.xlu0 %v94, 124
    %v192 = vpop.permute.xlu0 %191
    %193 = vrot.lane.b32.xlu0 %v98, 124
    %v194 = vpop.permute.xlu0 %193
    %195 = vrot.lane.b32.xlu0 %v102, 124
    %v196 = vpop.permute.xlu0 %195
    %197 = vrot.lane.b32.xlu0 %v106, 124
    %v198 = vpop.permute.xlu0 %197
    %199 = vrot.lane.b32.xlu0 %v110, 124
    %v200 = vpop.permute.xlu0 %199
    %201 = vrot.lane.b32.xlu0 %v114, 124
    %v202 = vpop.permute.xlu0 %201
    %211 = vrot.lane.b32.xlu0 %v86, 123
    %v212 = vpop.permute.xlu0 %211
    %213 = vrot.lane.b32.xlu0 %v90, 123
    %v214 = vpop.permute.xlu0 %213
    %215 = vrot.lane.b32.xlu0 %v94, 123
    %v216 = vpop.permute.xlu0 %215
    %217 = vrot.lane.b32.xlu0 %v98, 123
    %v218 = vpop.permute.xlu0 %217
    %219 = vrot.lane.b32.xlu0 %v102, 123
    %v220 = vpop.permute.xlu0 %219
    %221 = vrot.lane.b32.xlu0 %v106, 123
    %v222 = vpop.permute.xlu0 %221
    %223 = vrot.lane.b32.xlu0 %v110, 123
    %v224 = vpop.permute.xlu0 %223
    %225 = vrot.lane.b32.xlu0 %v114, 123
    %v226 = vpop.permute.xlu0 %225
    %235 = vrot.lane.b32.xlu0 %v86, 122
    %v236 = vpop.permute.xlu0 %235
    %237 = vrot.lane.b32.xlu0 %v90, 122
    %v238 = vpop.permute.xlu0 %237
    %239 = vrot.lane.b32.xlu0 %v94, 122
    %v240 = vpop.permute.xlu0 %239
    %241 = vrot.lane.b32.xlu0 %v98, 122
    %v242 = vpop.permute.xlu0 %241
    %243 = vrot.lane.b32.xlu0 %v102, 122
    %v244 = vpop.permute.xlu0 %243
    %245 = vrot.lane.b32.xlu0 %v106, 122
    %v246 = vpop.permute.xlu0 %245
    %247 = vrot.lane.b32.xlu0 %v110, 122
    %v248 = vpop.permute.xlu0 %247
    %249 = vrot.lane.b32.xlu0 %v114, 122
    %v250 = vpop.permute.xlu0 %249
    %259 = vrot.lane.b32.xlu0 %v86, 121
    %v260 = vpop.permute.xlu0 %259
    %261 = vrot.lane.b32.xlu0 %v90, 121
    %v262 = vpop.permute.xlu0 %261
    %263 = vrot.lane.b32.xlu0 %v94, 121
    %v264 = vpop.permute.xlu0 %263
    %265 = vrot.lane.b32.xlu0 %v98, 121
    %v266 = vpop.permute.xlu0 %265
    %267 = vrot.lane.b32.xlu0 %v102, 121
    %v268 = vpop.permute.xlu0 %267
    %269 = vrot.lane.b32.xlu0 %v106, 121
    %v270 = vpop.permute.xlu0 %269
    %271 = vrot.lane.b32.xlu0 %v110, 121
    %v272 = vpop.permute.xlu0 %271
    %273 = vrot.lane.b32.xlu0 %v114, 121
    %v274 = vpop.permute.xlu0 %273
    %vm283 = vcmask 1040384
    %v284 = vsel %vm283, %v41, %v116
    %v285 = vsel %vm283, %v48, %v118
    %v286 = vsel %vm283, %v49, %v120
    %v287 = vsel %vm283, %v50, %v122
    %v288 = vsel %vm283, %v65, %v124
    %v289 = vsel %vm283, %v72, %v126
    %v290 = vsel %vm283, %v73, %v128
    %v291 = vsel %vm283, %v74, %v130
    %vm292 = vcmask 1041408
    %v293 = vsel %vm292, %v284, %v140
    %v294 = vsel %vm292, %v285, %v142
    %v295 = vsel %vm292, %v286, %v144
    %v296 = vsel %vm292, %v287, %v146
    %v297 = vsel %vm292, %v288, %v148
    %v298 = vsel %vm292, %v289, %v150
    %v299 = vsel %vm292, %v290, %v152
    %v300 = vsel %vm292, %v291, %v154
    %vm301 = vcmask 1042432
    %v302 = vsel %vm301, %v293, %v164
    %v303 = vsel %vm301, %v294, %v166
    %v304 = vsel %vm301, %v295, %v168
    %v305 = vsel %vm301, %v296, %v170
    %v306 = vsel %vm301, %v297, %v172
    %v307 = vsel %vm301, %v298, %v174
    %v308 = vsel %vm301, %v299, %v176
    %v309 = vsel %vm301, %v300, %v178
    %vm310 = vcmask 1043456
    %v311 = vsel %vm310, %v302, %v188
    %v312 = vsel %vm310, %v303, %v190
    %v313 = vsel %vm310, %v304, %v192
    %v314 = vsel %vm310, %v305, %v194
    %v315 = vsel %vm310, %v306, %v196
    %v316 = vsel %vm310, %v307, %v198
    %v317 = vsel %vm310, %v308, %v200
    %v318 = vsel %vm310, %v309, %v202
    %vm319 = vcmask 1044480
    %v320 = vsel %vm319, %v311, %v212
    %v321 = vsel %vm319, %v312, %v214
    %v322 = vsel %vm319, %v313, %v216
    %v323 = vsel %vm319, %v314, %v218
    %v324 = vsel %vm319, %v315, %v220
    %v325 = vsel %vm319, %v316, %v222
    %v326 = vsel %vm319, %v317, %v224
    %v327 = vsel %vm319, %v318, %v226
    %vm328 = vcmask 1045504
    %v329 = vsel %vm328, %v320, %v236
    %v330 = vsel %vm328, %v321, %v238
    %v331 = vsel %vm328, %v322, %v240
    %v332 = vsel %vm328, %v323, %v242
    %v333 = vsel %vm328, %v324, %v244
    %v334 = vsel %vm328, %v325, %v246
    %v335 = vsel %vm328, %v326, %v248
    %v336 = vsel %vm328, %v327, %v250
    %vm337 = vcmask 1046528
    %v338 = vsel %vm337, %v329, %v260
    %v339 = vsel %vm337, %v330, %v262
    %v340 = vsel %vm337, %v331, %v264
    %v341 = vsel %vm337, %v332, %v266
    %v342 = vsel %vm337, %v333, %v268
    %v343 = vsel %vm337, %v334, %v270
    %v344 = vsel %vm337, %v335, %v272
    %v345 = vsel %vm337, %v336, %v274
    %v346 = vmul.f32 %v338, %v338
    %v347 = vmul.f32 %v342, %v342
    %vm348 = vcmask 72704
    %v349 = vsel %vm348, %v346, 0.0
    %v350 = vrot.slane %v349, 4
    %v351 = vadd.f32 %v349, %v350
    %v352 = vrot.slane %v351, 2
    %v353 = vadd.f32 %v351, %v352
    %v354 = vrot.slane %v353, 1
    %v355 = vadd.f32 %v353, %v354
    %v356 = vsel %vm348, %v347, 0.0
    %v357 = vrot.slane %v356, 4
    %v358 = vadd.f32 %v356, %v357
    %v359 = vrot.slane %v358, 2
    %v360 = vadd.f32 %v358, %v359
    %v361 = vrot.slane %v360, 1
    %v362 = vadd.f32 %v360, %v361
    %vm363 = vcmask 64512
    %v365 = vsel %vm363, %v17, 0
    %367 = vmatprep.subr.mxu0 0.0
    %368 = vmatpush1.msra.mxu0 0.0
    %369 = vmatprep.subr.mxu0 0.0
    %370 = vmatpush1.msra.mxu0 0.0
    %371 = vmatprep.subr.mxu0 0.0
    %372 = vmatpush1.msra.mxu0 0.0
    %373 = vmatprep.subr.mxu0 0.0
    %374 = vmatpush1.msra.mxu0 0.0
    %375 = vmatprep.subr.mxu0 0.0
    %376 = vmatpush1.msra.mxu0 0.0
    %377 = vmatprep.subr.mxu0 0.0
    %378 = vmatpush1.msra.mxu0 0.0
    %379 = vmatprep.subr.mxu0 0.0
    %380 = vmatpush1.msra.mxu0 0.0
    %381 = vmatprep.subr.mxu0 0.0
    %382 = vmatpush1.msra.mxu0 0.0
    %383 = vmatprep.subr.mxu0 0.0
    %384 = vmatpush1.msra.mxu0 0.0
    %385 = vmatprep.subr.mxu0 0.0
    %386 = vmatpush1.msra.mxu0 0.0
    %387 = vmatprep.subr.mxu0 0.0
    %388 = vmatpush1.msra.mxu0 0.0
    %389 = vmatprep.subr.mxu0 0.0
    %390 = vmatpush1.msra.mxu0 0.0
    %391 = vmatprep.subr.mxu0 0.0
    %392 = vmatpush1.msra.mxu0 0.0
    %393 = vmatprep.subr.mxu0 0.0
    %394 = vmatpush1.msra.mxu0 0.0
    %395 = vmatprep.subr.mxu0 0.0
    %396 = vmatpush1.msra.mxu0 0.0
    %397 = vmatprep.subr.mxu0 0.0
    %398 = vmatpush1.msra.mxu0 %v338
    %399 = vmatprep.subr.mxu0 0.0
    %400 = vmatpush2.msra.mxu0 0.0
    %401 = vmatprep.subr.mxu0 0.0
    %402 = vmatpush2.msra.mxu0 0.0
    %403 = vmatprep.subr.mxu0 0.0
    %404 = vmatpush2.msra.mxu0 0.0
    %405 = vmatprep.subr.mxu0 0.0
    %406 = vmatpush2.msra.mxu0 0.0
    %407 = vmatprep.subr.mxu0 0.0
    %408 = vmatpush2.msra.mxu0 0.0
    %409 = vmatprep.subr.mxu0 0.0
    %410 = vmatpush2.msra.mxu0 0.0
    %411 = vmatprep.subr.mxu0 0.0
    %412 = vmatpush2.msra.mxu0 0.0
    %413 = vmatprep.subr.mxu0 0.0
    %414 = vmatpush2.msra.mxu0 0.0
    %415 = vmatprep.subr.mxu0 0.0
    %416 = vmatpush2.msra.mxu0 0.0
    %417 = vmatprep.subr.mxu0 0.0
    %418 = vmatpush2.msra.mxu0 0.0
    %419 = vmatprep.subr.mxu0 0.0
    %420 = vmatpush2.msra.mxu0 0.0
    %421 = vmatprep.subr.mxu0 0.0
    %422 = vmatpush2.msra.mxu0 0.0
    %423 = vmatprep.subr.mxu0 0.0
    %424 = vmatpush2.msra.mxu0 0.0
    %425 = vmatprep.subr.mxu0 0.0
    %426 = vmatpush2.msra.mxu0 0.0
    %427 = vmatprep.subr.mxu0 0.0
    %428 = vmatpush2.msra.mxu0 0.0
    %429 = vmatprep.subr.mxu0 0.0
    %430 = vmatpush2.msra.mxu0 0.0
    %431 = vmatprep.mubr.f32.mxu0 0.0
    %432 = vmatmul.mubr.f32.gmra.mxu0 %v365
    %v433 = vpop.f32.mrf.mxu0
    %v434 = vadd.f32 0.0, %v433
    %v435 = vpop.f32.mrf.mxu0
    %436 = vdwg.mxu0
    %437 = vmatprep.subr.mxu0 0.0
    %438 = vmatpush1.msra.mxu0 0.0
    %439 = vmatprep.subr.mxu0 0.0
    %440 = vmatpush1.msra.mxu0 0.0
    %441 = vmatprep.subr.mxu0 0.0
    %442 = vmatpush1.msra.mxu0 0.0
    %443 = vmatprep.subr.mxu0 0.0
    %444 = vmatpush1.msra.mxu0 0.0
    %445 = vmatprep.subr.mxu0 0.0
    %446 = vmatpush1.msra.mxu0 0.0
    %447 = vmatprep.subr.mxu0 0.0
    %448 = vmatpush1.msra.mxu0 0.0
    %449 = vmatprep.subr.mxu0 0.0
    %450 = vmatpush1.msra.mxu0 0.0
    %451 = vmatprep.subr.mxu0 0.0
    %452 = vmatpush1.msra.mxu0 0.0
    %453 = vmatprep.subr.mxu0 0.0
    %454 = vmatpush1.msra.mxu0 0.0
    %455 = vmatprep.subr.mxu0 0.0
    %456 = vmatpush1.msra.mxu0 0.0
    %457 = vmatprep.subr.mxu0 0.0
    %458 = vmatpush1.msra.mxu0 0.0
    %459 = vmatprep.subr.mxu0 0.0
    %460 = vmatpush1.msra.mxu0 0.0
    %461 = vmatprep.subr.mxu0 0.0
    %462 = vmatpush1.msra.mxu0 0.0
    %463 = vmatprep.subr.mxu0 0.0
    %464 = vmatpush1.msra.mxu0 0.0
    %465 = vmatprep.subr.mxu0 0.0
    %466 = vmatpush1.msra.mxu0 0.0
    %467 = vmatprep.subr.mxu0 0.0
    %468 = vmatpush1.msra.mxu0 %v342
    %469 = vmatprep.subr.mxu0 0.0
    %470 = vmatpush2.msra.mxu0 0.0
    %471 = vmatprep.subr.mxu0 0.0
    %472 = vmatpush2.msra.mxu0 0.0
    %473 = vmatprep.subr.mxu0 0.0
    %474 = vmatpush2.msra.mxu0 0.0
    %475 = vmatprep.subr.mxu0 0.0
    %476 = vmatpush2.msra.mxu0 0.0
    %477 = vmatprep.subr.mxu0 0.0
    %478 = vmatpush2.msra.mxu0 0.0
    %479 = vmatprep.subr.mxu0 0.0
    %480 = vmatpush2.msra.mxu0 0.0
    %481 = vmatprep.subr.mxu0 0.0
    %482 = vmatpush2.msra.mxu0 0.0
    %483 = vmatprep.subr.mxu0 0.0
    %484 = vmatpush2.msra.mxu0 0.0
    %485 = vmatprep.subr.mxu0 0.0
    %486 = vmatpush2.msra.mxu0 0.0
    %487 = vmatprep.subr.mxu0 0.0
    %488 = vmatpush2.msra.mxu0 0.0
    %489 = vmatprep.subr.mxu0 0.0
    %490 = vmatpush2.msra.mxu0 0.0
    %491 = vmatprep.subr.mxu0 0.0
    %492 = vmatpush2.msra.mxu0 0.0
    %493 = vmatprep.subr.mxu0 0.0
    %494 = vmatpush2.msra.mxu0 0.0
    %495 = vmatprep.subr.mxu0 0.0
    %496 = vmatpush2.msra.mxu0 0.0
    %497 = vmatprep.subr.mxu0 0.0
    %498 = vmatpush2.msra.mxu0 0.0
    %499 = vmatprep.subr.mxu0 0.0
    %500 = vmatpush2.msra.mxu0 0.0
    %501 = vmatprep.mubr.f32.mxu0 0.0
    %502 = vmatmul.mubr.f32.gmra.mxu0 %v365
    %v503 = vpop.f32.mrf.mxu0
    %v504 = vadd.f32 0.0, %v503
    %v505 = vpop.f32.mrf.mxu0
    %506 = vdwg.mxu0
    %508 = vset.pattern.permute.xlu0 0
    %509 = vperm.xlu0 %508, %v21
    %v510 = vpop.permute.xlu0 %509
    %v512 = vadd.f32 %v510, %v355
    %v513 = vadd.f32 %v510, %v362
    %v514 = vmul.f32 %v434, 2.0
    %v515 = vmul.f32 %v504, 2.0
    %v516 = vsub.f32 %v512, %v514
    %v517 = vsub.f32 %v513, %v515
    %v518 = vmax.f32 %v516, 0.0
    %v519 = vmax.f32 %v517, 0.0
    %vm520 = vcmask 70656
    %v521 = vsel %vm520, %v518, inf
    %522 = vmin.xlane.f32.xlu0 %v521
    %v523 = vpop.xlane.xlu0 %522
    %v524 = vsel %vm520, %v519, inf
    %525 = vmin.xlane.f32.xlu0 %v524
    %v526 = vpop.xlane.xlu0 %525
    %v527 = vmul.f32 %v339, %v339
    %v528 = vmul.f32 %v343, %v343
    %v529 = vsel %vm348, %v527, 0.0
    %v530 = vrot.slane %v529, 4
    %v531 = vadd.f32 %v529, %v530
    %v532 = vrot.slane %v531, 2
    %v533 = vadd.f32 %v531, %v532
    %v534 = vrot.slane %v533, 1
    %v535 = vadd.f32 %v533, %v534
    %v536 = vsel %vm348, %v528, 0.0
    %v537 = vrot.slane %v536, 4
    %v538 = vadd.f32 %v536, %v537
    %v539 = vrot.slane %v538, 2
    %v540 = vadd.f32 %v538, %v539
    %v541 = vrot.slane %v540, 1
    %v542 = vadd.f32 %v540, %v541
    %v544 = vsel %vm363, %v18, 0
    %546 = vmatprep.subr.mxu0 0.0
    %547 = vmatpush1.msra.mxu0 0.0
    %548 = vmatprep.subr.mxu0 0.0
    %549 = vmatpush1.msra.mxu0 0.0
    %550 = vmatprep.subr.mxu0 0.0
    %551 = vmatpush1.msra.mxu0 0.0
    %552 = vmatprep.subr.mxu0 0.0
    %553 = vmatpush1.msra.mxu0 0.0
    %554 = vmatprep.subr.mxu0 0.0
    %555 = vmatpush1.msra.mxu0 0.0
    %556 = vmatprep.subr.mxu0 0.0
    %557 = vmatpush1.msra.mxu0 0.0
    %558 = vmatprep.subr.mxu0 0.0
    %559 = vmatpush1.msra.mxu0 0.0
    %560 = vmatprep.subr.mxu0 0.0
    %561 = vmatpush1.msra.mxu0 0.0
    %562 = vmatprep.subr.mxu0 0.0
    %563 = vmatpush1.msra.mxu0 0.0
    %564 = vmatprep.subr.mxu0 0.0
    %565 = vmatpush1.msra.mxu0 0.0
    %566 = vmatprep.subr.mxu0 0.0
    %567 = vmatpush1.msra.mxu0 0.0
    %568 = vmatprep.subr.mxu0 0.0
    %569 = vmatpush1.msra.mxu0 0.0
    %570 = vmatprep.subr.mxu0 0.0
    %571 = vmatpush1.msra.mxu0 0.0
    %572 = vmatprep.subr.mxu0 0.0
    %573 = vmatpush1.msra.mxu0 0.0
    %574 = vmatprep.subr.mxu0 0.0
    %575 = vmatpush1.msra.mxu0 0.0
    %576 = vmatprep.subr.mxu0 0.0
    %577 = vmatpush1.msra.mxu0 %v339
    %578 = vmatprep.subr.mxu0 0.0
    %579 = vmatpush2.msra.mxu0 0.0
    %580 = vmatprep.subr.mxu0 0.0
    %581 = vmatpush2.msra.mxu0 0.0
    %582 = vmatprep.subr.mxu0 0.0
    %583 = vmatpush2.msra.mxu0 0.0
    %584 = vmatprep.subr.mxu0 0.0
    %585 = vmatpush2.msra.mxu0 0.0
    %586 = vmatprep.subr.mxu0 0.0
    %587 = vmatpush2.msra.mxu0 0.0
    %588 = vmatprep.subr.mxu0 0.0
    %589 = vmatpush2.msra.mxu0 0.0
    %590 = vmatprep.subr.mxu0 0.0
    %591 = vmatpush2.msra.mxu0 0.0
    %592 = vmatprep.subr.mxu0 0.0
    %593 = vmatpush2.msra.mxu0 0.0
    %594 = vmatprep.subr.mxu0 0.0
    %595 = vmatpush2.msra.mxu0 0.0
    %596 = vmatprep.subr.mxu0 0.0
    %597 = vmatpush2.msra.mxu0 0.0
    %598 = vmatprep.subr.mxu0 0.0
    %599 = vmatpush2.msra.mxu0 0.0
    %600 = vmatprep.subr.mxu0 0.0
    %601 = vmatpush2.msra.mxu0 0.0
    %602 = vmatprep.subr.mxu0 0.0
    %603 = vmatpush2.msra.mxu0 0.0
    %604 = vmatprep.subr.mxu0 0.0
    %605 = vmatpush2.msra.mxu0 0.0
    %606 = vmatprep.subr.mxu0 0.0
    %607 = vmatpush2.msra.mxu0 0.0
    %608 = vmatprep.subr.mxu0 0.0
    %609 = vmatpush2.msra.mxu0 0.0
    %610 = vmatprep.mubr.f32.mxu0 0.0
    %611 = vmatmul.mubr.f32.gmra.mxu0 %v544
    %v612 = vpop.f32.mrf.mxu0
    %v613 = vadd.f32 0.0, %v612
    %v614 = vpop.f32.mrf.mxu0
    %615 = vdwg.mxu0
    %616 = vmatprep.subr.mxu0 0.0
    %617 = vmatpush1.msra.mxu0 0.0
    %618 = vmatprep.subr.mxu0 0.0
    %619 = vmatpush1.msra.mxu0 0.0
    %620 = vmatprep.subr.mxu0 0.0
    %621 = vmatpush1.msra.mxu0 0.0
    %622 = vmatprep.subr.mxu0 0.0
    %623 = vmatpush1.msra.mxu0 0.0
    %624 = vmatprep.subr.mxu0 0.0
    %625 = vmatpush1.msra.mxu0 0.0
    %626 = vmatprep.subr.mxu0 0.0
    %627 = vmatpush1.msra.mxu0 0.0
    %628 = vmatprep.subr.mxu0 0.0
    %629 = vmatpush1.msra.mxu0 0.0
    %630 = vmatprep.subr.mxu0 0.0
    %631 = vmatpush1.msra.mxu0 0.0
    %632 = vmatprep.subr.mxu0 0.0
    %633 = vmatpush1.msra.mxu0 0.0
    %634 = vmatprep.subr.mxu0 0.0
    %635 = vmatpush1.msra.mxu0 0.0
    %636 = vmatprep.subr.mxu0 0.0
    %637 = vmatpush1.msra.mxu0 0.0
    %638 = vmatprep.subr.mxu0 0.0
    %639 = vmatpush1.msra.mxu0 0.0
    %640 = vmatprep.subr.mxu0 0.0
    %641 = vmatpush1.msra.mxu0 0.0
    %642 = vmatprep.subr.mxu0 0.0
    %643 = vmatpush1.msra.mxu0 0.0
    %644 = vmatprep.subr.mxu0 0.0
    %645 = vmatpush1.msra.mxu0 0.0
    %646 = vmatprep.subr.mxu0 0.0
    %647 = vmatpush1.msra.mxu0 %v343
    %648 = vmatprep.subr.mxu0 0.0
    %649 = vmatpush2.msra.mxu0 0.0
    %650 = vmatprep.subr.mxu0 0.0
    %651 = vmatpush2.msra.mxu0 0.0
    %652 = vmatprep.subr.mxu0 0.0
    %653 = vmatpush2.msra.mxu0 0.0
    %654 = vmatprep.subr.mxu0 0.0
    %655 = vmatpush2.msra.mxu0 0.0
    %656 = vmatprep.subr.mxu0 0.0
    %657 = vmatpush2.msra.mxu0 0.0
    %658 = vmatprep.subr.mxu0 0.0
    %659 = vmatpush2.msra.mxu0 0.0
    %660 = vmatprep.subr.mxu0 0.0
    %661 = vmatpush2.msra.mxu0 0.0
    %662 = vmatprep.subr.mxu0 0.0
    %663 = vmatpush2.msra.mxu0 0.0
    %664 = vmatprep.subr.mxu0 0.0
    %665 = vmatpush2.msra.mxu0 0.0
    %666 = vmatprep.subr.mxu0 0.0
    %667 = vmatpush2.msra.mxu0 0.0
    %668 = vmatprep.subr.mxu0 0.0
    %669 = vmatpush2.msra.mxu0 0.0
    %670 = vmatprep.subr.mxu0 0.0
    %671 = vmatpush2.msra.mxu0 0.0
    %672 = vmatprep.subr.mxu0 0.0
    %673 = vmatpush2.msra.mxu0 0.0
    %674 = vmatprep.subr.mxu0 0.0
    %675 = vmatpush2.msra.mxu0 0.0
    %676 = vmatprep.subr.mxu0 0.0
    %677 = vmatpush2.msra.mxu0 0.0
    %678 = vmatprep.subr.mxu0 0.0
    %679 = vmatpush2.msra.mxu0 0.0
    %680 = vmatprep.mubr.f32.mxu0 0.0
    %681 = vmatmul.mubr.f32.gmra.mxu0 %v544
    %v682 = vpop.f32.mrf.mxu0
    %v683 = vadd.f32 0.0, %v682
    %v684 = vpop.f32.mrf.mxu0
    %685 = vdwg.mxu0
    %687 = vset.pattern.permute.xlu0 0
    %688 = vperm.xlu0 %687, %v22
    %v689 = vpop.permute.xlu0 %688
    %v691 = vadd.f32 %v689, %v535
    %v692 = vadd.f32 %v689, %v542
    %v693 = vmul.f32 %v613, 2.0
    %v694 = vmul.f32 %v683, 2.0
    %v695 = vsub.f32 %v691, %v693
    %v696 = vsub.f32 %v692, %v694
    %v697 = vmax.f32 %v695, 0.0
    %v698 = vmax.f32 %v696, 0.0
    %v699 = vsel %vm520, %v697, inf
    %700 = vmin.xlane.f32.xlu0 %v699
    %v701 = vpop.xlane.xlu0 %700
    %v702 = vsel %vm520, %v698, inf
    %703 = vmin.xlane.f32.xlu0 %v702
    %v704 = vpop.xlane.xlu0 %703
    %v705 = vmin.f32 %v523, %v701
    %v706 = vmin.f32 %v526, %v704
    %v707 = vmul.f32 %v340, %v340
    %v708 = vmul.f32 %v344, %v344
    %v709 = vsel %vm348, %v707, 0.0
    %v710 = vrot.slane %v709, 4
    %v711 = vadd.f32 %v709, %v710
    %v712 = vrot.slane %v711, 2
    %v713 = vadd.f32 %v711, %v712
    %v714 = vrot.slane %v713, 1
    %v715 = vadd.f32 %v713, %v714
    %v716 = vsel %vm348, %v708, 0.0
    %v717 = vrot.slane %v716, 4
    %v718 = vadd.f32 %v716, %v717
    %v719 = vrot.slane %v718, 2
    %v720 = vadd.f32 %v718, %v719
    %v721 = vrot.slane %v720, 1
    %v722 = vadd.f32 %v720, %v721
    %v724 = vsel %vm363, %v19, 0
    %726 = vmatprep.subr.mxu0 0.0
    %727 = vmatpush1.msra.mxu0 0.0
    %728 = vmatprep.subr.mxu0 0.0
    %729 = vmatpush1.msra.mxu0 0.0
    %730 = vmatprep.subr.mxu0 0.0
    %731 = vmatpush1.msra.mxu0 0.0
    %732 = vmatprep.subr.mxu0 0.0
    %733 = vmatpush1.msra.mxu0 0.0
    %734 = vmatprep.subr.mxu0 0.0
    %735 = vmatpush1.msra.mxu0 0.0
    %736 = vmatprep.subr.mxu0 0.0
    %737 = vmatpush1.msra.mxu0 0.0
    %738 = vmatprep.subr.mxu0 0.0
    %739 = vmatpush1.msra.mxu0 0.0
    %740 = vmatprep.subr.mxu0 0.0
    %741 = vmatpush1.msra.mxu0 0.0
    %742 = vmatprep.subr.mxu0 0.0
    %743 = vmatpush1.msra.mxu0 0.0
    %744 = vmatprep.subr.mxu0 0.0
    %745 = vmatpush1.msra.mxu0 0.0
    %746 = vmatprep.subr.mxu0 0.0
    %747 = vmatpush1.msra.mxu0 0.0
    %748 = vmatprep.subr.mxu0 0.0
    %749 = vmatpush1.msra.mxu0 0.0
    %750 = vmatprep.subr.mxu0 0.0
    %751 = vmatpush1.msra.mxu0 0.0
    %752 = vmatprep.subr.mxu0 0.0
    %753 = vmatpush1.msra.mxu0 0.0
    %754 = vmatprep.subr.mxu0 0.0
    %755 = vmatpush1.msra.mxu0 0.0
    %756 = vmatprep.subr.mxu0 0.0
    %757 = vmatpush1.msra.mxu0 %v340
    %758 = vmatprep.subr.mxu0 0.0
    %759 = vmatpush2.msra.mxu0 0.0
    %760 = vmatprep.subr.mxu0 0.0
    %761 = vmatpush2.msra.mxu0 0.0
    %762 = vmatprep.subr.mxu0 0.0
    %763 = vmatpush2.msra.mxu0 0.0
    %764 = vmatprep.subr.mxu0 0.0
    %765 = vmatpush2.msra.mxu0 0.0
    %766 = vmatprep.subr.mxu0 0.0
    %767 = vmatpush2.msra.mxu0 0.0
    %768 = vmatprep.subr.mxu0 0.0
    %769 = vmatpush2.msra.mxu0 0.0
    %770 = vmatprep.subr.mxu0 0.0
    %771 = vmatpush2.msra.mxu0 0.0
    %772 = vmatprep.subr.mxu0 0.0
    %773 = vmatpush2.msra.mxu0 0.0
    %774 = vmatprep.subr.mxu0 0.0
    %775 = vmatpush2.msra.mxu0 0.0
    %776 = vmatprep.subr.mxu0 0.0
    %777 = vmatpush2.msra.mxu0 0.0
    %778 = vmatprep.subr.mxu0 0.0
    %779 = vmatpush2.msra.mxu0 0.0
    %780 = vmatprep.subr.mxu0 0.0
    %781 = vmatpush2.msra.mxu0 0.0
    %782 = vmatprep.subr.mxu0 0.0
    %783 = vmatpush2.msra.mxu0 0.0
    %784 = vmatprep.subr.mxu0 0.0
    %785 = vmatpush2.msra.mxu0 0.0
    %786 = vmatprep.subr.mxu0 0.0
    %787 = vmatpush2.msra.mxu0 0.0
    %788 = vmatprep.subr.mxu0 0.0
    %789 = vmatpush2.msra.mxu0 0.0
    %790 = vmatprep.mubr.f32.mxu0 0.0
    %791 = vmatmul.mubr.f32.gmra.mxu0 %v724
    %v792 = vpop.f32.mrf.mxu0
    %v793 = vadd.f32 0.0, %v792
    %v794 = vpop.f32.mrf.mxu0
    %795 = vdwg.mxu0
    %796 = vmatprep.subr.mxu0 0.0
    %797 = vmatpush1.msra.mxu0 0.0
    %798 = vmatprep.subr.mxu0 0.0
    %799 = vmatpush1.msra.mxu0 0.0
    %800 = vmatprep.subr.mxu0 0.0
    %801 = vmatpush1.msra.mxu0 0.0
    %802 = vmatprep.subr.mxu0 0.0
    %803 = vmatpush1.msra.mxu0 0.0
    %804 = vmatprep.subr.mxu0 0.0
    %805 = vmatpush1.msra.mxu0 0.0
    %806 = vmatprep.subr.mxu0 0.0
    %807 = vmatpush1.msra.mxu0 0.0
    %808 = vmatprep.subr.mxu0 0.0
    %809 = vmatpush1.msra.mxu0 0.0
    %810 = vmatprep.subr.mxu0 0.0
    %811 = vmatpush1.msra.mxu0 0.0
    %812 = vmatprep.subr.mxu0 0.0
    %813 = vmatpush1.msra.mxu0 0.0
    %814 = vmatprep.subr.mxu0 0.0
    %815 = vmatpush1.msra.mxu0 0.0
    %816 = vmatprep.subr.mxu0 0.0
    %817 = vmatpush1.msra.mxu0 0.0
    %818 = vmatprep.subr.mxu0 0.0
    %819 = vmatpush1.msra.mxu0 0.0
    %820 = vmatprep.subr.mxu0 0.0
    %821 = vmatpush1.msra.mxu0 0.0
    %822 = vmatprep.subr.mxu0 0.0
    %823 = vmatpush1.msra.mxu0 0.0
    %824 = vmatprep.subr.mxu0 0.0
    %825 = vmatpush1.msra.mxu0 0.0
    %826 = vmatprep.subr.mxu0 0.0
    %827 = vmatpush1.msra.mxu0 %v344
    %828 = vmatprep.subr.mxu0 0.0
    %829 = vmatpush2.msra.mxu0 0.0
    %830 = vmatprep.subr.mxu0 0.0
    %831 = vmatpush2.msra.mxu0 0.0
    %832 = vmatprep.subr.mxu0 0.0
    %833 = vmatpush2.msra.mxu0 0.0
    %834 = vmatprep.subr.mxu0 0.0
    %835 = vmatpush2.msra.mxu0 0.0
    %836 = vmatprep.subr.mxu0 0.0
    %837 = vmatpush2.msra.mxu0 0.0
    %838 = vmatprep.subr.mxu0 0.0
    %839 = vmatpush2.msra.mxu0 0.0
    %840 = vmatprep.subr.mxu0 0.0
    %841 = vmatpush2.msra.mxu0 0.0
    %842 = vmatprep.subr.mxu0 0.0
    %843 = vmatpush2.msra.mxu0 0.0
    %844 = vmatprep.subr.mxu0 0.0
    %845 = vmatpush2.msra.mxu0 0.0
    %846 = vmatprep.subr.mxu0 0.0
    %847 = vmatpush2.msra.mxu0 0.0
    %848 = vmatprep.subr.mxu0 0.0
    %849 = vmatpush2.msra.mxu0 0.0
    %850 = vmatprep.subr.mxu0 0.0
    %851 = vmatpush2.msra.mxu0 0.0
    %852 = vmatprep.subr.mxu0 0.0
    %853 = vmatpush2.msra.mxu0 0.0
    %854 = vmatprep.subr.mxu0 0.0
    %855 = vmatpush2.msra.mxu0 0.0
    %856 = vmatprep.subr.mxu0 0.0
    %857 = vmatpush2.msra.mxu0 0.0
    %858 = vmatprep.subr.mxu0 0.0
    %859 = vmatpush2.msra.mxu0 0.0
    %860 = vmatprep.mubr.f32.mxu0 0.0
    %861 = vmatmul.mubr.f32.gmra.mxu0 %v724
    %v862 = vpop.f32.mrf.mxu0
    %v863 = vadd.f32 0.0, %v862
    %v864 = vpop.f32.mrf.mxu0
    %865 = vdwg.mxu0
    %867 = vset.pattern.permute.xlu0 0
    %868 = vperm.xlu0 %867, %v23
    %v869 = vpop.permute.xlu0 %868
    %v871 = vadd.f32 %v869, %v715
    %v872 = vadd.f32 %v869, %v722
    %v873 = vmul.f32 %v793, 2.0
    %v874 = vmul.f32 %v863, 2.0
    %v875 = vsub.f32 %v871, %v873
    %v876 = vsub.f32 %v872, %v874
    %v877 = vmax.f32 %v875, 0.0
    %v878 = vmax.f32 %v876, 0.0
    %v879 = vsel %vm520, %v877, inf
    %880 = vmin.xlane.f32.xlu0 %v879
    %v881 = vpop.xlane.xlu0 %880
    %v882 = vsel %vm520, %v878, inf
    %883 = vmin.xlane.f32.xlu0 %v882
    %v884 = vpop.xlane.xlu0 %883
    %v885 = vmin.f32 %v705, %v881
    %v886 = vmin.f32 %v706, %v884
    %v887 = vmul.f32 %v341, %v341
    %v888 = vmul.f32 %v345, %v345
    %v889 = vsel %vm348, %v887, 0.0
    %v890 = vrot.slane %v889, 4
    %v891 = vadd.f32 %v889, %v890
    %v892 = vrot.slane %v891, 2
    %v893 = vadd.f32 %v891, %v892
    %v894 = vrot.slane %v893, 1
    %v895 = vadd.f32 %v893, %v894
    %v896 = vsel %vm348, %v888, 0.0
    %v897 = vrot.slane %v896, 4
    %v898 = vadd.f32 %v896, %v897
    %v899 = vrot.slane %v898, 2
    %v900 = vadd.f32 %v898, %v899
    %v901 = vrot.slane %v900, 1
    %v902 = vadd.f32 %v900, %v901
    %v904 = vsel %vm363, %v20, 0
    %906 = vmatprep.subr.mxu0 0.0
    %907 = vmatpush1.msra.mxu0 0.0
    %908 = vmatprep.subr.mxu0 0.0
    %909 = vmatpush1.msra.mxu0 0.0
    %910 = vmatprep.subr.mxu0 0.0
    %911 = vmatpush1.msra.mxu0 0.0
    %912 = vmatprep.subr.mxu0 0.0
    %913 = vmatpush1.msra.mxu0 0.0
    %914 = vmatprep.subr.mxu0 0.0
    %915 = vmatpush1.msra.mxu0 0.0
    %916 = vmatprep.subr.mxu0 0.0
    %917 = vmatpush1.msra.mxu0 0.0
    %918 = vmatprep.subr.mxu0 0.0
    %919 = vmatpush1.msra.mxu0 0.0
    %920 = vmatprep.subr.mxu0 0.0
    %921 = vmatpush1.msra.mxu0 0.0
    %922 = vmatprep.subr.mxu0 0.0
    %923 = vmatpush1.msra.mxu0 0.0
    %924 = vmatprep.subr.mxu0 0.0
    %925 = vmatpush1.msra.mxu0 0.0
    %926 = vmatprep.subr.mxu0 0.0
    %927 = vmatpush1.msra.mxu0 0.0
    %928 = vmatprep.subr.mxu0 0.0
    %929 = vmatpush1.msra.mxu0 0.0
    %930 = vmatprep.subr.mxu0 0.0
    %931 = vmatpush1.msra.mxu0 0.0
    %932 = vmatprep.subr.mxu0 0.0
    %933 = vmatpush1.msra.mxu0 0.0
    %934 = vmatprep.subr.mxu0 0.0
    %935 = vmatpush1.msra.mxu0 0.0
    %936 = vmatprep.subr.mxu0 0.0
    %937 = vmatpush1.msra.mxu0 %v341
    %938 = vmatprep.subr.mxu0 0.0
    %939 = vmatpush2.msra.mxu0 0.0
    %940 = vmatprep.subr.mxu0 0.0
    %941 = vmatpush2.msra.mxu0 0.0
    %942 = vmatprep.subr.mxu0 0.0
    %943 = vmatpush2.msra.mxu0 0.0
    %944 = vmatprep.subr.mxu0 0.0
    %945 = vmatpush2.msra.mxu0 0.0
    %946 = vmatprep.subr.mxu0 0.0
    %947 = vmatpush2.msra.mxu0 0.0
    %948 = vmatprep.subr.mxu0 0.0
    %949 = vmatpush2.msra.mxu0 0.0
    %950 = vmatprep.subr.mxu0 0.0
    %951 = vmatpush2.msra.mxu0 0.0
    %952 = vmatprep.subr.mxu0 0.0
    %953 = vmatpush2.msra.mxu0 0.0
    %954 = vmatprep.subr.mxu0 0.0
    %955 = vmatpush2.msra.mxu0 0.0
    %956 = vmatprep.subr.mxu0 0.0
    %957 = vmatpush2.msra.mxu0 0.0
    %958 = vmatprep.subr.mxu0 0.0
    %959 = vmatpush2.msra.mxu0 0.0
    %960 = vmatprep.subr.mxu0 0.0
    %961 = vmatpush2.msra.mxu0 0.0
    %962 = vmatprep.subr.mxu0 0.0
    %963 = vmatpush2.msra.mxu0 0.0
    %964 = vmatprep.subr.mxu0 0.0
    %965 = vmatpush2.msra.mxu0 0.0
    %966 = vmatprep.subr.mxu0 0.0
    %967 = vmatpush2.msra.mxu0 0.0
    %968 = vmatprep.subr.mxu0 0.0
    %969 = vmatpush2.msra.mxu0 0.0
    %970 = vmatprep.mubr.f32.mxu0 0.0
    %971 = vmatmul.mubr.f32.gmra.mxu0 %v904
    %v972 = vpop.f32.mrf.mxu0
    %v973 = vadd.f32 0.0, %v972
    %v974 = vpop.f32.mrf.mxu0
    %975 = vdwg.mxu0
    %976 = vmatprep.subr.mxu0 0.0
    %977 = vmatpush1.msra.mxu0 0.0
    %978 = vmatprep.subr.mxu0 0.0
    %979 = vmatpush1.msra.mxu0 0.0
    %980 = vmatprep.subr.mxu0 0.0
    %981 = vmatpush1.msra.mxu0 0.0
    %982 = vmatprep.subr.mxu0 0.0
    %983 = vmatpush1.msra.mxu0 0.0
    %984 = vmatprep.subr.mxu0 0.0
    %985 = vmatpush1.msra.mxu0 0.0
    %986 = vmatprep.subr.mxu0 0.0
    %987 = vmatpush1.msra.mxu0 0.0
    %988 = vmatprep.subr.mxu0 0.0
    %989 = vmatpush1.msra.mxu0 0.0
    %990 = vmatprep.subr.mxu0 0.0
    %991 = vmatpush1.msra.mxu0 0.0
    %992 = vmatprep.subr.mxu0 0.0
    %993 = vmatpush1.msra.mxu0 0.0
    %994 = vmatprep.subr.mxu0 0.0
    %995 = vmatpush1.msra.mxu0 0.0
    %996 = vmatprep.subr.mxu0 0.0
    %997 = vmatpush1.msra.mxu0 0.0
    %998 = vmatprep.subr.mxu0 0.0
    %999 = vmatpush1.msra.mxu0 0.0
    %1000 = vmatprep.subr.mxu0 0.0
    %1001 = vmatpush1.msra.mxu0 0.0
    %1002 = vmatprep.subr.mxu0 0.0
    %1003 = vmatpush1.msra.mxu0 0.0
    %1004 = vmatprep.subr.mxu0 0.0
    %1005 = vmatpush1.msra.mxu0 0.0
    %1006 = vmatprep.subr.mxu0 0.0
    %1007 = vmatpush1.msra.mxu0 %v345
    %1008 = vmatprep.subr.mxu0 0.0
    %1009 = vmatpush2.msra.mxu0 0.0
    %1010 = vmatprep.subr.mxu0 0.0
    %1011 = vmatpush2.msra.mxu0 0.0
    %1012 = vmatprep.subr.mxu0 0.0
    %1013 = vmatpush2.msra.mxu0 0.0
    %1014 = vmatprep.subr.mxu0 0.0
    %1015 = vmatpush2.msra.mxu0 0.0
    %1016 = vmatprep.subr.mxu0 0.0
    %1017 = vmatpush2.msra.mxu0 0.0
    %1018 = vmatprep.subr.mxu0 0.0
    %1019 = vmatpush2.msra.mxu0 0.0
    %1020 = vmatprep.subr.mxu0 0.0
    %1021 = vmatpush2.msra.mxu0 0.0
    %1022 = vmatprep.subr.mxu0 0.0
    %1023 = vmatpush2.msra.mxu0 0.0
    %1024 = vmatprep.subr.mxu0 0.0
    %1025 = vmatpush2.msra.mxu0 0.0
    %1026 = vmatprep.subr.mxu0 0.0
    %1027 = vmatpush2.msra.mxu0 0.0
    %1028 = vmatprep.subr.mxu0 0.0
    %1029 = vmatpush2.msra.mxu0 0.0
    %1030 = vmatprep.subr.mxu0 0.0
    %1031 = vmatpush2.msra.mxu0 0.0
    %1032 = vmatprep.subr.mxu0 0.0
    %1033 = vmatpush2.msra.mxu0 0.0
    %1034 = vmatprep.subr.mxu0 0.0
    %1035 = vmatpush2.msra.mxu0 0.0
    %1036 = vmatprep.subr.mxu0 0.0
    %1037 = vmatpush2.msra.mxu0 0.0
    %1038 = vmatprep.subr.mxu0 0.0
    %1039 = vmatpush2.msra.mxu0 0.0
    %1040 = vmatprep.mubr.f32.mxu0 0.0
    %1041 = vmatmul.mubr.f32.gmra.mxu0 %v904
    %v1042 = vpop.f32.mrf.mxu0
    %v1043 = vadd.f32 0.0, %v1042
    %v1044 = vpop.f32.mrf.mxu0
    %1045 = vdwg.mxu0
    %1047 = vset.pattern.permute.xlu0 0
    %1048 = vperm.xlu0 %1047, %v24
    %v1049 = vpop.permute.xlu0 %1048
    %v1051 = vadd.f32 %v1049, %v895
    %v1052 = vadd.f32 %v1049, %v902
    %v1053 = vmul.f32 %v973, 2.0
    %v1054 = vmul.f32 %v1043, 2.0
    %v1055 = vsub.f32 %v1051, %v1053
    %v1056 = vsub.f32 %v1052, %v1054
    %v1057 = vmax.f32 %v1055, 0.0
    %v1058 = vmax.f32 %v1056, 0.0
    %v1059 = vsel %vm520, %v1057, inf
    %1060 = vmin.xlane.f32.xlu0 %v1059
    %v1061 = vpop.xlane.xlu0 %1060
    %v1062 = vsel %vm520, %v1058, inf
    %1063 = vmin.xlane.f32.xlu0 %v1062
    %v1064 = vpop.xlane.xlu0 %1063
    %v1065 = vmin.f32 %v885, %v1061
    %v1066 = vmin.f32 %v886, %v1064
    %v1067 = vrsqrt.pop %v1065
    %v1068 = vmul.f32 %v1065, %v1067
    %vm1069 = vcmp.eq.f32.partialorder %v1065, inf
    %v1070 = vsel %vm1069, %v1065, %v1068
    %vm1071 = vcmp.eq.f32.partialorder %v1065, 0.0
    %v1072 = vand.u32 %v1065, 2147483648
    %v1073 = vsel %vm1071, %v1072, %v1070
    %v1074 = vrsqrt.pop %v1066
    %v1075 = vmul.f32 %v1066, %v1074
    %vm1076 = vcmp.eq.f32.partialorder %v1066, inf
    %v1077 = vsel %vm1076, %v1066, %v1075
    %vm1078 = vcmp.eq.f32.partialorder %v1066, 0.0
    %v1079 = vand.u32 %v1066, 2147483648
    %v1080 = vsel %vm1078, %v1079, %v1077
    %v1083 = vlaneseq
    %v1084 = vand.u32 %v1083, 127
    %v1085 = vlaneseq
    %v1086 = vshrl.u32 %v1085, 7
    %v1087 = vsub.s32 %v1084, %v1086
    %v1088 = vrot.slane %v1073, %v1087
    %v1089 = vlaneseq
    %v1090 = vshrl.u32 %v1089, 7
    %v1091 = vsub.s32 %v1084, %v1090
    %v1092 = vrot.slane %v1080, %v1091
    %vm1095 = vcmask 40960
    %1096 = vst.msk [vmem:[#allocation2] sm:$0x1] %vm1095, %v1088
    %1097 = vst.msk [vmem:[#allocation2 + $0x1] sm:$0x1] %vm1095, %v1092
    // Predicated region
    $region14: #{tpu_custom_call.1} parent=1 // pred_check
      _
    $region15: #{tpu_custom_call.1} parent=1 // pred_check_branch
      %1099 = sbr.rel (0) target = $region17
    $region16: #{tpu_custom_call.1} parent=1 // pred_region
      %s1101 = ssub.s32 32, 32
      %1102 = vsyncadd [#allocation3], %s1101
      %s1103 = sshll.u32 [#allocation2], 4
      %s1104 = int_to_ptr.vmem [resolvable:$true] %s1103
      %1109 = dma.vmem_to_hbm [thread:$0]  %s1104, 32, %s3, [#allocation3], 16, 16, 1
    $region17: #{tpu_custom_call.1} parent=1 // pred_fallthru
      _
    // Predicated region
    $region18: #{tpu_custom_call.1} parent=1 // pred_check
      _
    $region19: #{tpu_custom_call.1} parent=1 // pred_check_branch
      %1111 = sbr.rel (0) target = $region21
    $region20: #{tpu_custom_call.1} parent=1 // pred_region
      %1112 = dma.done [#allocation3], 32
    $region21: #{tpu_custom_call.1} parent=1 // pred_fallthru
      _
    %1113 = vsyncpa [#allocation3], 1

</llo_original>
